<compile_context>
chip_gen: v7x
topology: tpu7x:2x2x1
jax: 0.10.0
libtpu: 0.0.40
codegen_flags: <defaults>
</compile_context>

<pallas_src>
import jax
import jax.numpy as jnp
from jax import lax
from jax.experimental import pallas as pl
from jax.experimental.pallas import tpu as pltpu


def net3_kernel(x_ref, w_ref, b_ref, o_ref):
    # x: (TB, K), w: (N, K) (PyTorch layout), b: (N, 1) f32, o: (N, TB) f32
    x = x_ref[...]
    w = w_ref[...]
    b = b_ref[...]

    # logits^T: (N, TB) = W @ x^T, contracting the K axis of both operands
    # (MXU matmul, f32 accumulation). Producing the transposed result directly
    # puts the batch on the 128-lane axis and the 10 classes on sublanes.
    logits = lax.dot_general(
        w, x,
        dimension_numbers=(((1,), (1,)), ((), ())),
        preferred_element_type=jnp.float32,
    ) + b

    # log_softmax over the class axis (axis 0, 10 sublanes): numerically
    # stable, f32. Sublane reductions ride the XLU, exp rides the EUP, all on
    # lane-dense vregs. Garbage columns from a ragged last x tile stay
    # confined to their own lanes and are masked on the store.
    m = jnp.max(logits, axis=0, keepdims=True)                       # (1, TB)
    shifted = logits - m
    lse = jnp.log(jnp.sum(jnp.exp(shifted), axis=0, keepdims=True))  # (1, TB)
    o_ref[...] = (shifted - lse).astype(o_ref.dtype)


def _round_up(v, m):
    return ((v + m - 1) // m) * m


def _choose_batch_tile(B, max_tile_b):
    """Batch tile: a multiple of 128 (lane-dense output axis; also covers bf16
    sublane packing of the x tile), sized so large batches give >= ~8 grid
    steps (pipelining + megacore balance) but never exceeding max_tile_b."""
    max_tile_b = max(128, (int(max_tile_b) // 128) * 128)
    tb = _round_up(max(1, (B + 7) // 8), 128)
    return max(128, min(tb, max_tile_b))


def net3_forward(x, weight, bias, *, max_tile_b=2048):
    """x: (B, 128) f32 or bf16; weight: (10, 128) (PyTorch layout); bias: (10,).

    Returns (B, 10) f32 log-probabilities matching F.log_softmax(fc2(x), dim=1).
    """
    B, K = x.shape
    N = weight.shape[0]

    # Never cast the big activation stream in the wrapper (that would add a
    # full extra HBM pass over x); dispatch on the caller-provided dtype.
    # Casting the tiny weight / reshaping the bias is negligible.
    w_in = weight if weight.dtype == x.dtype else weight.astype(x.dtype)
    b_in = bias.astype(jnp.float32).reshape(N, 1)

    TB = _choose_batch_tile(B, max_tile_b)
    grid = (pl.cdiv(B, TB),)  # ragged last tile: padded reads, masked writes

    bytes_x = jnp.dtype(x.dtype).itemsize
    bytes_w = jnp.dtype(w_in.dtype).itemsize
    cost = pl.CostEstimate(
        flops=2 * B * K * N,
        transcendentals=B * (N + 1),
        bytes_accessed=B * K * bytes_x + N * K * bytes_w + N * 4 + B * N * 4,
    )

    out_t = pl.pallas_call(
        net3_kernel,
        out_shape=jax.ShapeDtypeStruct((N, B), jnp.float32),
        grid=grid,
        in_specs=[
            # Streaming x tiles (double-buffered by the Pallas pipeline).
            # On v5e one could deepen this with pipeline_mode=pl.Buffered(3).
            pl.BlockSpec((TB, K), lambda i: (i, 0)),
            # Resident weight / bias blocks (constant across the grid).
            pl.BlockSpec((N, K), lambda i: (0, 0)),
            pl.BlockSpec((N, 1), lambda i: (0, 0)),
        ],
        # Lane-dense (N, TB) blocks of the transposed (N, B) output.
        out_specs=pl.BlockSpec((N, TB), lambda i: (0, i)),
        compiler_params=pltpu.CompilerParams(
            dimension_semantics=("parallel",)),  # megacore sharding on v7x
        cost_estimate=cost,
    )(x, w_in, b_in)

    # Tiny (10, B) -> (B, 10) layout plumbing to match the module's output.
    return out_t.T


if __name__ == "__main__":
    key = jax.random.PRNGKey(0)
    kx, kw, kb, kx2 = jax.random.split(key, 4)

    IN, OUT = 128, 10

    # Deterministic params mimicking nn.Linear default: U(-1/sqrt(in), 1/sqrt(in))
    bound = 1.0 / jnp.sqrt(jnp.float32(IN))
    weight = jax.random.uniform(kw, (OUT, IN), jnp.float32, -bound, bound)
    bias = jax.random.uniform(kb, (OUT,), jnp.float32, -bound, bound)

    # Small batch: single (ragged) tile, grid=(1,)
    B = 8
    x = jax.random.normal(kx, (B, IN), jnp.float32)
    out = jax.block_until_ready(net3_forward(x, weight, bias))
    ref = jax.nn.log_softmax(x @ weight.T + bias, axis=1)
    assert out.shape == (B, OUT)
    assert jnp.allclose(out, ref, atol=1e-4, rtol=1e-4), "f32 mismatch vs reference"

    # Ragged multi-tile batch: 300 = 2 full 128-row tiles + masked 44-row tail.
    B2 = 300
    x2 = jax.random.normal(kx2, (B2, IN), jnp.float32)
    out2 = jax.block_until_ready(net3_forward(x2, weight, bias))
    ref2 = jax.nn.log_softmax(x2 @ weight.T + bias, axis=1)
    assert out2.shape == (B2, OUT)
    assert jnp.allclose(out2, ref2, atol=1e-4, rtol=1e-4), "tiled f32 mismatch vs reference"

    # bf16 path is taken only when the caller already provides bf16 activations
    # (no wrapper-side cast of x).
    out_bf16 = jax.block_until_ready(
        net3_forward(x2.astype(jnp.bfloat16), weight, bias))
    assert jnp.allclose(out_bf16, ref2, atol=2e-2, rtol=2e-2), "bf16 mismatch vs reference"

    print("KERNEL_OK")
</pallas_src>

<mosaic_0001>
module attributes {stable_mosaic.version = 11 : i64} {
  func.func @net3_kernel(%arg0: i32, %arg1: memref<128x128xf32, #tpu.memory_space<vmem>>, %arg2: memref<10x128xf32, #tpu.memory_space<vmem>>, %arg3: memref<10x1xf32, #tpu.memory_space<vmem>>, %arg4: memref<10x128xf32, #tpu.memory_space<vmem>>) attributes {dimension_semantics = [#tpu.dimension_semantics<parallel>], iteration_bounds = array<i64: 1>, scalar_prefetch = 0 : i64, scratch_operands = 0 : i64, tpu.core_type = #tpu.core_type<tc>, window_params = [{transform_indices = @transform_0, window_bounds = array<i64: 128, 128>}, {pipeline_mode = #tpu.pipeline_mode<synchronous>, transform_indices = @transform_1, window_bounds = array<i64: 10, 128>}, {pipeline_mode = #tpu.pipeline_mode<synchronous>, transform_indices = @transform_2, window_bounds = array<i64: 10, 1>}, {transform_indices = @transform_3, window_bounds = array<i64: 10, 128>}]} {
    %c0 = arith.constant 0 : index
    %c0_0 = arith.constant 0 : index
    %0 = vector.load %arg1[%c0, %c0_0] : memref<128x128xf32, #tpu.memory_space<vmem>>, vector<128x128xf32>
    %c0_1 = arith.constant 0 : index
    %c0_2 = arith.constant 0 : index
    %1 = vector.load %arg2[%c0_1, %c0_2] : memref<10x128xf32, #tpu.memory_space<vmem>>, vector<10x128xf32>
    %c0_3 = arith.constant 0 : index
    %c0_4 = arith.constant 0 : index
    %2 = vector.load %arg3[%c0_3, %c0_4] : memref<10x1xf32, #tpu.memory_space<vmem>>, vector<10x1xf32>
    %cst = arith.constant dense<0.000000e+00> : vector<10x128xf32>
    %3 = tpu.matmul %1, %0, %cst {dimension_numbers = #tpu.dot_dimension_numbers<[1], [1], [0], [0], [0, 0, 1, 0], [], []>} : vector<10x128xf32>, vector<128x128xf32>, vector<10x128xf32> -> vector<10x128xf32>
    %4 = vector.broadcast %2 : vector<10x1xf32> to vector<10x128xf32>
    %5 = arith.addf %3, %4 : vector<10x128xf32>
    %cst_5 = arith.constant dense<0xFF800000> : vector<128xf32>
    %6 = vector.multi_reduction <maximumf>, %5, %cst_5 [0] : vector<10x128xf32> to vector<128xf32>
    %7 = vector.shape_cast %6 : vector<128xf32> to vector<1x128xf32>
    %8 = vector.broadcast %7 : vector<1x128xf32> to vector<10x128xf32>
    %9 = arith.subf %5, %8 : vector<10x128xf32>
    %10 = math.exp %9 : vector<10x128xf32>
    %cst_6 = arith.constant dense<0.000000e+00> : vector<128xf32>
    %11 = vector.multi_reduction <add>, %10, %cst_6 [0] : vector<10x128xf32> to vector<128xf32>
    %12 = vector.shape_cast %11 : vector<128xf32> to vector<1x128xf32>
    %13 = math.log %12 : vector<1x128xf32>
    %14 = vector.broadcast %13 : vector<1x128xf32> to vector<10x128xf32>
    %15 = arith.subf %9, %14 : vector<10x128xf32>
    %c0_7 = arith.constant 0 : index
    %c0_8 = arith.constant 0 : index
    %16 = vector.load %arg4[%c0_7, %c0_8] : memref<10x128xf32, #tpu.memory_space<vmem>>, vector<10x128xf32>
    tpu.vector_store %arg4[%c0_7, %c0_8], %15 {strides = array<i32>} : memref<10x128xf32, #tpu.memory_space<vmem>>, vector<10x128xf32>,
    return
  }
  func.func @transform_0(%arg0: i32) -> (i32, i32) {
    %c0_i32 = arith.constant 0 : i32
    %c0_i32_0 = arith.constant 0 : i32
    return %arg0, %c0_i32 : i32, i32
  }
  func.func @transform_1(%arg0: i32) -> (i32, i32) {
    %c0_i32 = arith.constant 0 : i32
    %c0_i32_0 = arith.constant 0 : i32
    %c0_i32_1 = arith.constant 0 : i32
    return %c0_i32, %c0_i32_0 : i32, i32
  }
  func.func @transform_2(%arg0: i32) -> (i32, i32) {
    %c0_i32 = arith.constant 0 : i32
    %c0_i32_0 = arith.constant 0 : i32
    %c0_i32_1 = arith.constant 0 : i32
    return %c0_i32, %c0_i32_0 : i32, i32
  }
  func.func @transform_3(%arg0: i32) -> (i32, i32) {
    %c0_i32 = arith.constant 0 : i32
    %c0_i32_0 = arith.constant 0 : i32
    return %c0_i32, %arg0 : i32, i32
  }
}

</mosaic_0001>

<llo_original>
// kernel: tpu_custom_call.1
$region0: #{tpu_custom_call.1}
  #allocation0 [shape = 'u32[]', space=smem, size = 0x4, offset = 0x4, fixed_abs, tag = 'smem constant byte address 0x4 - core index']
  #allocation1 [shape = 'u32[144,128]{1,0:T(1,128)}', space=vmem, size = 0x12000, scoped, tag = 'internal scratch']
  %s0 = inlined_call_operand.hbm [shape: f32[8,128], index: 0, kind: input, shape index: {}]
  %s1 = inlined_call_operand.vmem [shape: f32[10,128], index: 1, kind: input, shape index: {}]
  %s2 = inlined_call_operand.vmem [shape: f32[10,1], index: 2, kind: input, shape index: {}]
  %s3 = inlined_call_operand.vmem [shape: f32[10,8], index: 3, kind: output, shape index: {}]
  %s4 = sld [smem:[#allocation0]]
  $region26: #{tpu_custom_call.1} parent=0
    _
  %s6 = ssub.s32 1, %s4
  %s7 = scalar_select 0, %s6, %s4
  $region1: #{tpu_custom_call.1} parent=0
    #allocation2 [shape = 'u8[65536]{0}', space=vmem, size = 0x10000, scoped, tag = 'input window, operand 0, single buffered']
    #allocation3 [shape = 's32[1]{0}', space=sflag, size = 0x4, scoped, tag = 'scoped memory for tpu_custom_call.1']
    %8 = vsyncpa [#allocation3], 0
    // Predicated region
    $region2: #{tpu_custom_call.1} parent=1 // pred_check
      _
    $region3: #{tpu_custom_call.1} parent=1 // pred_check_branch
      %10 = sbr.rel (0) target = $region5
    $region4: #{tpu_custom_call.1} parent=1 // pred_region
      %s12 = ssub.s32 2048, 128
      %13 = vsyncadd [#allocation3], %s12
      %s14 = sshll.u32 [#allocation2], 4
      %s15 = int_to_ptr.vmem [resolvable:$true] %s14
      %20 = dma.hbm_to_vmem [thread:$0]  %s0, 128, %s15, [#allocation3], 128, 128, 8
    $region5: #{tpu_custom_call.1} parent=1 // pred_fallthru
      _
    // Predicated region
    $region6: #{tpu_custom_call.1} parent=1 // pred_check
      _
    $region7: #{tpu_custom_call.1} parent=1 // pred_check_branch
      %22 = sbr.rel (0) target = $region9
    $region8: #{tpu_custom_call.1} parent=1 // pred_region
      _
    $region9: #{tpu_custom_call.1} parent=1 // pred_fallthru
      _
    // Predicated region
    $region10: #{tpu_custom_call.1} parent=1 // pred_check
      _
    $region11: #{tpu_custom_call.1} parent=1 // pred_check_branch
      %24 = sbr.rel (0) target = $region13
    $region12: #{tpu_custom_call.1} parent=1 // pred_region
      _
    $region13: #{tpu_custom_call.1} parent=1 // pred_fallthru
      _
    // Predicated region
    $region14: #{tpu_custom_call.1} parent=1 // pred_check
      _
    $region15: #{tpu_custom_call.1} parent=1 // pred_check_branch
      %26 = sbr.rel (0) target = $region17
    $region16: #{tpu_custom_call.1} parent=1 // pred_region
      %27 = dma.done [#allocation3], 2048
    $region17: #{tpu_custom_call.1} parent=1 // pred_fallthru
      _
    %v28 = vld [vmem:[#allocation2] sm:$0xff]
    %v29 = vld [vmem:[#allocation2 + $0x8] sm:$0xff]
    %v30 = vld [vmem:[#allocation2 + $0x10] sm:$0xff]
    %v31 = vld [vmem:[#allocation2 + $0x18] sm:$0xff]
    %v32 = vld [vmem:[#allocation2 + $0x20] sm:$0xff]
    %v33 = vld [vmem:[#allocation2 + $0x28] sm:$0xff]
    %v34 = vld [vmem:[#allocation2 + $0x30] sm:$0xff]
    %v35 = vld [vmem:[#allocation2 + $0x38] sm:$0xff]
    %v36 = vld [vmem:[#allocation2 + $0x40] sm:$0xff]
    %v37 = vld [vmem:[#allocation2 + $0x48] sm:$0xff]
    %v38 = vld [vmem:[#allocation2 + $0x50] sm:$0xff]
    %v39 = vld [vmem:[#allocation2 + $0x58] sm:$0xff]
    %v40 = vld [vmem:[#allocation2 + $0x60] sm:$0xff]
    %v41 = vld [vmem:[#allocation2 + $0x68] sm:$0xff]
    %v42 = vld [vmem:[#allocation2 + $0x70] sm:$0xff]
    %v43 = vld [vmem:[#allocation2 + $0x78] sm:$0xff]
    %v44 = vld [vmem:[%s1] sm:$0xff]
    %v45 = vld [vmem:[%s1 + $0x8] sm:$0x3]
    %v46 = vld [vmem:[%s2] sm:$0xff]
    %v47 = vld [vmem:[%s2 + $0x8] sm:$0x3]
    %49 = vset.pattern.permute.xlu0 0
    %50 = vperm.xlu0 %49, %v46
    %v51 = vpop.permute.xlu0 %50
    %54 = vset.pattern.permute.xlu0 0
    %55 = vperm.xlu0 %54, %v47
    %v56 = vpop.permute.xlu0 %55
    %58 = vmatprep.subr.mxu0 0.0
    %59 = vmatpush1.xpose.msra.mxu0 %v28
    %60 = vmatprep.subr.mxu0 0.0
    %61 = vmatpush1.xpose.msra.mxu0 %v29
    %62 = vmatprep.subr.mxu0 0.0
    %63 = vmatpush1.xpose.msra.mxu0 %v30
    %64 = vmatprep.subr.mxu0 0.0
    %65 = vmatpush1.xpose.msra.mxu0 %v31
    %66 = vmatprep.subr.mxu0 0.0
    %67 = vmatpush1.xpose.msra.mxu0 %v32
    %68 = vmatprep.subr.mxu0 0.0
    %69 = vmatpush1.xpose.msra.mxu0 %v33
    %70 = vmatprep.subr.mxu0 0.0
    %71 = vmatpush1.xpose.msra.mxu0 %v34
    %72 = vmatprep.subr.mxu0 0.0
    %73 = vmatpush1.xpose.msra.mxu0 %v35
    %74 = vmatprep.subr.mxu0 0.0
    %75 = vmatpush1.xpose.msra.mxu0 %v36
    %76 = vmatprep.subr.mxu0 0.0
    %77 = vmatpush1.xpose.msra.mxu0 %v37
    %78 = vmatprep.subr.mxu0 0.0
    %79 = vmatpush1.xpose.msra.mxu0 %v38
    %80 = vmatprep.subr.mxu0 0.0
    %81 = vmatpush1.xpose.msra.mxu0 %v39
    %82 = vmatprep.subr.mxu0 0.0
    %83 = vmatpush1.xpose.msra.mxu0 %v40
    %84 = vmatprep.subr.mxu0 0.0
    %85 = vmatpush1.xpose.msra.mxu0 %v41
    %86 = vmatprep.subr.mxu0 0.0
    %87 = vmatpush1.xpose.msra.mxu0 %v42
    %88 = vmatprep.subr.mxu0 0.0
    %89 = vmatpush1.xpose.msra.mxu0 %v43
    %90 = vmatprep.subr.mxu0 0.0
    %91 = vmatpush1.xpose.msra.mxu0 0.0
    %92 = vmatprep.subr.mxu0 0.0
    %93 = vmatpush1.xpose.msra.mxu0 0.0
    %94 = vmatprep.subr.mxu0 0.0
    %95 = vmatpush1.xpose.msra.mxu0 0.0
    %96 = vmatprep.subr.mxu0 0.0
    %97 = vmatpush1.xpose.msra.mxu0 0.0
    %98 = vmatprep.subr.mxu0 0.0
    %99 = vmatpush1.xpose.msra.mxu0 0.0
    %100 = vmatprep.subr.mxu0 0.0
    %101 = vmatpush1.xpose.msra.mxu0 0.0
    %102 = vmatprep.subr.mxu0 0.0
    %103 = vmatpush1.xpose.msra.mxu0 0.0
    %104 = vmatprep.subr.mxu0 0.0
    %105 = vmatpush1.xpose.msra.mxu0 0.0
    %106 = vmatprep.subr.mxu0 0.0
    %107 = vmatpush1.xpose.msra.mxu0 0.0
    %108 = vmatprep.subr.mxu0 0.0
    %109 = vmatpush1.xpose.msra.mxu0 0.0
    %110 = vmatprep.subr.mxu0 0.0
    %111 = vmatpush1.xpose.msra.mxu0 0.0
    %112 = vmatprep.subr.mxu0 0.0
    %113 = vmatpush1.xpose.msra.mxu0 0.0
    %114 = vmatprep.subr.mxu0 0.0
    %115 = vmatpush1.xpose.msra.mxu0 0.0
    %116 = vmatprep.subr.mxu0 0.0
    %117 = vmatpush1.xpose.msra.mxu0 0.0
    %118 = vmatprep.subr.mxu0 0.0
    %119 = vmatpush1.xpose.msra.mxu0 0.0
    %120 = vmatprep.subr.mxu0 0.0
    %121 = vmatpush1.xpose.msra.mxu0 0.0
    %122 = vmatprep.mubr.f32.mxu0 0.0
    %123 = vmatmul.mubr.f32.gmra.mrb[0].mxu0 %v44
    %v124 = vpop.f32.mrb[0].mxu0
    %v125 = vadd.f32 %v51, %v124
    %v126 = vpop.f32.mrb[0].mxu0
    %127 = vmatprep.mubr.f32.mxu0 0.0
    %128 = vmatmul.mubr.f32.gmra.mrb[0].mxu0 %v45
    %v129 = vpop.f32.mrb[0].mxu0
    %v130 = vadd.f32 %v56, %v129
    %v131 = vpop.f32.mrb[0].mxu0
    %132 = vdwg.mxu0
    %vm133 = vcmask 1041408
    %v134 = vsel %vm133, %v130, -inf
    %v135 = vmax.f32 %v125, %v134
    %v136 = vrot.slane %v135, 4
    %v137 = vmax.f32 %v135, %v136
    %v138 = vrot.slane %v137, 2
    %v139 = vmax.f32 %v137, %v138
    %v140 = vrot.slane %v139, 1
    %v141 = vmax.f32 %v139, %v140
    %v142 = vsub.f32 %v125, %v141
    %v143 = vsub.f32 %v130, %v141
    %v144 = vmul.f32 %v142, 1.442695
    %v145 = vpow.pop %v144
    %v146 = vmul.f32 %v143, 1.442695
    %v147 = vpow.pop %v146
    %v148 = vsel %vm133, %v147, 0.0
    %v149 = vadd.f32 %v145, %v148
    %v150 = vrot.slane %v149, 4
    %v151 = vadd.f32 %v149, %v150
    %v152 = vrot.slane %v151, 2
    %v153 = vadd.f32 %v151, %v152
    %v154 = vrot.slane %v153, 1
    %v155 = vadd.f32 %v153, %v154
    %v156 = vlog2.pop %v155
    %v157 = vmul.f32 %v156, 0.6931472
    %v158 = vsub.f32 %v142, %v157
    %v159 = vsub.f32 %v143, %v157
    %160 = vst [vmem:[%s3] sm:$0xff] %v158
    %161 = vst [vmem:[%s3 + $0x8] sm:$0x3] %v159
    // Predicated region
    $region18: #{tpu_custom_call.1} parent=1 // pred_check
      _
    $region19: #{tpu_custom_call.1} parent=1 // pred_check_branch
      %163 = sbr.rel (0) target = $region21
    $region20: #{tpu_custom_call.1} parent=1 // pred_region
      _
    $region21: #{tpu_custom_call.1} parent=1 // pred_fallthru
      _
    // Predicated region
    $region22: #{tpu_custom_call.1} parent=1 // pred_check
      _
    $region23: #{tpu_custom_call.1} parent=1 // pred_check_branch
      %165 = sbr.rel (0) target = $region25
    $region24: #{tpu_custom_call.1} parent=1 // pred_region
      _
    $region25: #{tpu_custom_call.1} parent=1 // pred_fallthru
      _
    %166 = vsyncpa [#allocation3], 1

</llo_original>
